<compile_context>
chip_gen: v7x
topology: tpu7x:2x2x1
jax: 0.10.0
libtpu: 0.0.40
codegen_flags: <defaults>
</compile_context>

<pallas_src>
import jax
import jax.numpy as jnp
from jax import lax
from jax.experimental import pallas as pl
from jax.experimental.pallas import tpu as pltpu


# ----------------------------------------------------------------------------
# Generation-aware VMEM sizing.
# ----------------------------------------------------------------------------
def _vmem_limit_bytes():
    """~85% of detected per-core VMEM (v5e/v6e: ~108 MiB, v7x: ~54 MiB);
    conservative 64 MiB assumption if the query is unavailable."""
    cap = 64 * 1024 * 1024
    try:
        cap = int(pltpu.get_tpu_info().vmem_capacity_bytes)
    except Exception:
        pass
    cap = min(max(cap, 32 * 1024 * 1024), 128 * 1024 * 1024)
    return int(cap * 0.85)


def _pick_batch_tile(n, s, s_pad, d, k_max, c_pad, o, vmem_limit):
    """Largest batch tile (multiple of 8) fitting ~70% of the VMEM limit after
    subtracting the grid-invariant weight/mask footprint.  Prefers a divisor
    of n (no tail padding) with an even number of grid steps (v7x: 2 TCs share
    the 'parallel' batch axis) and never fewer than 2 steps when n >= 16."""
    if n <= 8:
        return n
    # Grid-invariant operands (counted double-buffered to stay conservative).
    fixed = 2 * (k_max * d * c_pad * 2       # packed conv weights (bf16)
                 + s * c_pad * 4             # bias / valid-window mask (f32)
                 + c_pad * o * 2 + o * 4)    # fc weight (bf16) + bias (f32)
    per_row = (2 * s * d * 4                 # double-buffered f32 input block
               + s_pad * d * 2               # padded bf16 input scratch
               + s * c_pad * 4               # f32 conv accumulator
               + 2 * o * 4)                  # double-buffered output block
    if d < 128:
        per_row += s * k_max * d * 2         # materialized im2col operand
    budget = int(0.7 * vmem_limit) - fixed
    cap = min(n, budget // max(per_row, 1))
    if n >= 16:
        cap = min(cap, n // 2)               # >= 2 grid steps for 2-TC chips
    cap = max(8, (cap // 8) * 8)
    best = None
    for nb in range(cap, 7, -8):
        if n % nb == 0:
            if (n // nb) % 2 == 0:
                return nb                    # divisor with even step count
            if best is None:
                best = nb                    # divisor, odd step count
    return best if best is not None else cap  # no divisor -> padded tail tile


# ----------------------------------------------------------------------------
# Optional single-buffering of grid-invariant operands (probed once).
# ----------------------------------------------------------------------------
_SINGLE_BUFFER_MODE = "unset"


def _single_buffer_mode():
    """Return pl.Buffered(1) if this JAX/Mosaic supports (and correctly
    executes) single-buffered BlockSpecs, else None.  Saves VMEM for the
    grid-invariant packed weights (matters most under v7x's 64 MiB)."""
    global _SINGLE_BUFFER_MODE
    if _SINGLE_BUFFER_MODE != "unset":
        return _SINGLE_BUFFER_MODE
    mode = None
    try:
        cand = pl.Buffered(1)

        def _probe(c_ref, o_ref):
            o_ref[...] = c_ref[...]

        const = jnp.arange(8 * 128, dtype=jnp.float32).reshape(8, 128)
        out = pl.pallas_call(
            _probe,
            out_shape=jax.ShapeDtypeStruct((16, 128), jnp.float32),
            grid=(2,),
            in_specs=[pl.BlockSpec((8, 128), lambda i: (0, 0),
                                   pipeline_mode=cand)],
            out_specs=pl.BlockSpec((8, 128), lambda i: (i, 0)),
        )(const)
        jax.block_until_ready(out)
        if bool(jnp.allclose(out, jnp.concatenate([const, const], axis=0))):
            mode = cand
    except Exception:
        mode = None
    _SINGLE_BUFFER_MODE = mode
    return mode


# ----------------------------------------------------------------------------
# Fused kernel: conv branches + bias/mask/ReLU + maxpool + fc + log_softmax
# ----------------------------------------------------------------------------
def _make_fused_kernel(seq_len, embed_dim, k_max, use_im2col):
    S, D = seq_len, embed_dim
    dn = (((2,), (0,)), ((), ()))  # contract last dim of x with first of W

    def kernel(x_ref, w_ref, bm_ref, fcw_ref, fcb_ref, out_ref, xpad_ref):
        # x_ref   : (Nb, S, D)          f32 (unpadded, straight from HBM)
        # w_ref   : (Kmax*D, Cp)        bf16 (block-packed conv weights)
        # bm_ref  : (1, S, Cp)          f32 (bias at valid pos, -1e30 elsewhere)
        # fcw_ref : (Cp, O)             bf16
        # fcb_ref : (1, O)              f32
        # out_ref : (Nb, O)             f32
        # xpad_ref: (Nb, S+Kmax-1, D)   bf16 VMEM scratch
        nb = x_ref.shape[0]

        # In-kernel f32->bf16 cast + right zero-extension of the time axis
        # (replaces the wrapper-side pad+cast HBM round trip).  The tail is
        # re-zeroed every step so correctness never depends on which core /
        # grid step touched the scratch first.
        xpad_ref[:, :S, :] = x_ref[...].astype(jnp.bfloat16)
        if k_max > 1:
            xpad_ref[:, S:S + k_max - 1, :] = jnp.zeros(
                (nb, k_max - 1, D), jnp.bfloat16)

        if use_im2col:
            # D < 128: widen the contraction depth to Kmax*D so the MXU sees
            # a deep enough K dimension (im2col over shifted windows).
            win = jnp.concatenate(
                [xpad_ref[:, k:k + S, :] for k in range(k_max)], axis=-1)
            acc = lax.dot_general(win, w_ref[...], dimension_numbers=dn,
                                  preferred_element_type=jnp.float32)
        else:
            # D >= 128: per-tap accumulation; avoids the Kmax-duplicated
            # im2col buffer, its shift/concat plumbing and zero-row MXU work.
            acc = lax.dot_general(xpad_ref[:, 0:S, :], w_ref[0:D, :],
                                  dimension_numbers=dn,
                                  preferred_element_type=jnp.float32)
            for k in range(1, k_max):
                acc += lax.dot_general(
                    xpad_ref[:, k:k + S, :], w_ref[k * D:(k + 1) * D, :],
                    dimension_numbers=dn,
                    preferred_element_type=jnp.float32)

        # Fused epilogue: bias + per-branch valid-window mask + ReLU in one
        # add + max.  Invalid / padded positions get -1e30 -> ReLU -> 0, which
        # can never win the max-pool (valid values are >= 0 after ReLU).
        acc = jnp.maximum(acc + bm_ref[...], 0.0)        # (Nb, S, Cp) f32

        # max_pool1d over time; channels of all branches are already packed,
        # so this is also the concat.  Stays in VMEM/registers.
        feats = jnp.max(acc, axis=1)                     # (Nb, Cp)

        # fc + log_softmax (bf16 MXU operands, f32 accumulate & softmax math).
        logits = jnp.dot(feats.astype(jnp.bfloat16), fcw_ref[...],
                         preferred_element_type=jnp.float32) + fcb_ref[...]
        m = jnp.max(logits, axis=-1, keepdims=True)
        z = logits - m
        lse = jnp.log(jnp.sum(jnp.exp(z), axis=-1, keepdims=True))
        out_ref[...] = (z - lse).astype(out_ref.dtype)

    return kernel


# ----------------------------------------------------------------------------
# Full forward: parameter packing (traced, one-time) + single pallas_call.
# ----------------------------------------------------------------------------
def cnn_classifier_forward(inputs, params, *, batch_tile=None):
    N, S, D = inputs.shape
    kernel_sizes = tuple(int(w.shape[0]) for (w, _) in params["convs"])
    C = int(params["convs"][0][0].shape[2])
    O = int(params["fc_w"].shape[1])
    k_max = max(kernel_sizes)
    total_c = len(kernel_sizes) * C
    assert S >= k_max, "sequence length must be >= max kernel size"
    s_pad = S + k_max - 1
    c_pad = ((total_c + 127) // 128) * 128     # lane-dense packed channel width
    NEG = jnp.float32(-1e30)

    # Pack all conv weights into one (Kmax*D, Cp) matrix: branch i's flattened
    # (K_i*D, C) weight occupies rows [0, K_i*D) of its C-column block, zeros
    # elsewhere.  The bias mask carries bias at valid window positions and
    # -1e30 at invalid ones (branch with tap size K has S-K+1 valid positions).
    w_cols, bm_cols = [], []
    for (w, b) in params["convs"]:
        K = int(w.shape[0])
        w_flat = w.reshape(K * D, C)
        w_cols.append(jnp.pad(w_flat, ((0, (k_max - K) * D), (0, 0))))
        valid = jnp.arange(S)[:, None] < (S - K + 1)          # (S, 1)
        bm_cols.append(jnp.where(valid, b.reshape(1, C).astype(jnp.float32),
                                 NEG))                        # (S, C)
    w_all = jnp.concatenate(w_cols, axis=1)                   # (Kmax*D, total_C)
    w_all = jnp.pad(w_all, ((0, 0), (0, c_pad - total_c))).astype(jnp.bfloat16)
    bias_mask = jnp.concatenate(bm_cols, axis=1)              # (S, total_C)
    bias_mask = jnp.pad(bias_mask, ((0, 0), (0, c_pad - total_c)))[None]
    bias_mask = bias_mask.astype(jnp.float32)                 # (1, S, Cp)
    fc_w = jnp.pad(params["fc_w"],
                   ((0, c_pad - total_c), (0, 0))).astype(jnp.bfloat16)
    fc_b = params["fc_b"].reshape(1, O).astype(jnp.float32)

    vmem_limit = _vmem_limit_bytes()
    if batch_tile is None:
        batch_tile = _pick_batch_tile(N, S, s_pad, D, k_max, c_pad, O,
                                      vmem_limit)
    batch_tile = max(1, int(batch_tile))

    # Remainder handling: pad the batch so every tile is full, slice after.
    # (The auto-picker prefers divisors of N, so this is usually a no-op.)
    n_steps = (N + batch_tile - 1) // batch_tile
    n_tail = n_steps * batch_tile - N
    x = inputs
    if n_tail:
        x = jnp.pad(x, ((0, n_tail), (0, 0), (0, 0)))

    kernel = _make_fused_kernel(S, D, k_max, use_im2col=(D < 128))

    sb = _single_buffer_mode()   # pl.Buffered(1) if supported, else None

    def const_spec(shape):
        idx = lambda i: (0,) * len(shape)
        if sb is not None:
            return pl.BlockSpec(shape, idx, pipeline_mode=sb)
        return pl.BlockSpec(shape, idx)

    # TODO(synk): dropout (training-only) not implemented; inference path only.
    # TODO(synk): for very long sequences, additionally tile the window axis
    # with an "arbitrary" grid dim and a running-max VMEM scratch.
    out = pl.pallas_call(
        kernel,
        out_shape=jax.ShapeDtypeStruct((n_steps * batch_tile, O), jnp.float32),
        grid=(n_steps,),
        in_specs=[
            pl.BlockSpec((batch_tile, S, D), lambda i: (i, 0, 0)),
            const_spec((k_max * D, c_pad)),
            const_spec((1, S, c_pad)),
            const_spec((c_pad, O)),
            const_spec((1, O)),
        ],
        out_specs=pl.BlockSpec((batch_tile, O), lambda i: (i, 0)),
        scratch_shapes=[pltpu.VMEM((batch_tile, s_pad, D), jnp.bfloat16)],
        compiler_params=pltpu.CompilerParams(
            dimension_semantics=("parallel",),    # megacore / 2-TC sharding
            vmem_limit_bytes=vmem_limit,          # sized per generation
        ),
    )(x, w_all, bias_mask, fc_w, fc_b)
    return out[:N] if n_tail else out


# ----------------------------------------------------------------------------
# Pure-JAX f32 reference for a sanity check.
# ----------------------------------------------------------------------------
def reference_forward(inputs, params):
    pooled = []
    for (w, b) in params["convs"]:
        K = w.shape[0]
        L = inputs.shape[1] - K + 1
        acc = sum(
            jnp.einsum("nld,dc->nlc", inputs[:, k:k + L, :], w[k])
            for k in range(K)
        ) + b[None, :, :]
        pooled.append(jnp.max(jnp.maximum(acc, 0.0), axis=1))
    concated = jnp.concatenate(pooled, axis=1)
    logits = concated @ params["fc_w"] + params["fc_b"]
    return jax.nn.log_softmax(logits, axis=1)


def make_params(key, embedding_dim, kernel_dim, kernel_sizes, output_size):
    params = {"convs": []}
    keys = jax.random.split(key, 2 * len(kernel_sizes) + 2)
    for i, K in enumerate(kernel_sizes):
        # PyTorch Conv2d weight (C, 1, K, D) -> stored here as (K, D, C).
        w = 0.1 * jax.random.normal(keys[2 * i], (K, embedding_dim, kernel_dim),
                                    dtype=jnp.float32)
        b = 0.1 * jax.random.normal(keys[2 * i + 1], (1, kernel_dim),
                                    dtype=jnp.float32)
        params["convs"].append((w, b))
    f_in = len(kernel_sizes) * kernel_dim
    params["fc_w"] = 0.1 * jax.random.normal(keys[-2], (f_in, output_size),
                                             dtype=jnp.float32)
    params["fc_b"] = 0.1 * jax.random.normal(keys[-1], (1, output_size),
                                             dtype=jnp.float32)
    return params


if __name__ == "__main__":
    # Small, shape-consistent config.
    batch = 2
    seq_len = 8
    embedding_dim = 32
    kernel_dim = 16
    kernel_sizes = (2, 3, 4)
    output_size = 4

    key = jax.random.PRNGKey(0)
    k_in, k_par = jax.random.split(key)

    # inputs: dense embeddings (N, S, D) -- the module's forward consumes these
    # directly (the nn.Embedding layer is unused in forward()).
    inputs = jax.random.normal(k_in, (batch, seq_len, embedding_dim),
                               dtype=jnp.float32)
    params = make_params(k_par, embedding_dim, kernel_dim, kernel_sizes,
                         output_size)

    out = jax.block_until_ready(cnn_classifier_forward(inputs, params))
    ref = jax.block_until_ready(reference_forward(inputs, params))

    assert out.shape == (batch, output_size), out.shape
    assert bool(jnp.all(jnp.isfinite(out)))
    # bf16 MXU operands vs f32 reference -> slightly loosened tolerance.
    assert bool(jnp.allclose(out, ref, rtol=2e-2, atol=2e-2)), (out, ref)

    print("KERNEL_OK")
</pallas_src>

<mosaic_0001>
module attributes {stable_mosaic.version = 11 : i64} {
  func.func @_probe(%arg0: i32, %arg1: memref<8x128xf32, #tpu.memory_space<vmem>>, %arg2: memref<8x128xf32, #tpu.memory_space<vmem>>) attributes {dimension_semantics = [#tpu.dimension_semantics<arbitrary>], iteration_bounds = array<i64: 2>, scalar_prefetch = 0 : i64, scratch_operands = 0 : i64, tpu.core_type = #tpu.core_type<tc>, window_params = [{pipeline_mode = #tpu.pipeline_mode<synchronous>, transform_indices = @transform_0, window_bounds = array<i64: 8, 128>}, {transform_indices = @transform_1, window_bounds = array<i64: 8, 128>}]} {
    %c0 = arith.constant 0 : index
    %c0_0 = arith.constant 0 : index
    %0 = vector.load %arg1[%c0, %c0_0] : memref<8x128xf32, #tpu.memory_space<vmem>>, vector<8x128xf32>
    %c0_1 = arith.constant 0 : index
    %c0_2 = arith.constant 0 : index
    %1 = vector.load %arg2[%c0_1, %c0_2] : memref<8x128xf32, #tpu.memory_space<vmem>>, vector<8x128xf32>
    tpu.vector_store %arg2[%c0_1, %c0_2], %0 {strides = array<i32>} : memref<8x128xf32, #tpu.memory_space<vmem>>, vector<8x128xf32>,
    return
  }
  func.func @transform_0(%arg0: i32) -> (i32, i32) {
    %c0_i32 = arith.constant 0 : i32
    %c0_i32_0 = arith.constant 0 : i32
    %c0_i32_1 = arith.constant 0 : i32
    return %c0_i32, %c0_i32_0 : i32, i32
  }
  func.func @transform_1(%arg0: i32) -> (i32, i32) {
    %c0_i32 = arith.constant 0 : i32
    %c0_i32_0 = arith.constant 0 : i32
    return %arg0, %c0_i32 : i32, i32
  }
}

module attributes {stable_mosaic.version = 11 : i64} {
  func.func @kernel(%arg0: i32, %arg1: memref<2x8x32xf32, #tpu.memory_space<vmem>>, %arg2: memref<128x128xbf16, #tpu.memory_space<vmem>>, %arg3: memref<1x8x128xf32, #tpu.memory_space<vmem>>, %arg4: memref<128x4xbf16, #tpu.memory_space<vmem>>, %arg5: memref<1x4xf32, #tpu.memory_space<vmem>>, %arg6: memref<2x4xf32, #tpu.memory_space<vmem>>, %arg7: memref<2x11x32xbf16, #tpu.memory_space<vmem>>) attributes {dimension_semantics = [#tpu.dimension_semantics<parallel>], iteration_bounds = array<i64: 1>, scalar_prefetch = 0 : i64, scratch_operands = 1 : i64, tpu.core_type = #tpu.core_type<tc>, window_params = [{transform_indices = @transform_0, window_bounds = array<i64: 2, 8, 32>}, {pipeline_mode = #tpu.pipeline_mode<synchronous>, transform_indices = @transform_1, window_bounds = array<i64: 128, 128>}, {pipeline_mode = #tpu.pipeline_mode<synchronous>, transform_indices = @transform_2, window_bounds = array<i64: 1, 8, 128>}, {pipeline_mode = #tpu.pipeline_mode<synchronous>, transform_indices = @transform_3, window_bounds = array<i64: 128, 4>}, {pipeline_mode = #tpu.pipeline_mode<synchronous>, transform_indices = @transform_4, window_bounds = array<i64: 1, 4>}, {transform_indices = @transform_5, window_bounds = array<i64: 2, 4>}]} {
    %c0 = arith.constant 0 : index
    %c0_0 = arith.constant 0 : index
    %c0_1 = arith.constant 0 : index
    %0 = vector.load %arg1[%c0, %c0_0, %c0_1] : memref<2x8x32xf32, #tpu.memory_space<vmem>>, vector<2x8x32xf32>
    %1 = arith.truncf %0 : vector<2x8x32xf32> to vector<2x8x32xbf16>
    %c0_2 = arith.constant 0 : index
    %c0_3 = arith.constant 0 : index
    %c0_4 = arith.constant 0 : index
    %2 = vector.load %arg7[%c0_2, %c0_3, %c0_4] : memref<2x11x32xbf16, #tpu.memory_space<vmem>>, vector<2x8x32xbf16>
    tpu.vector_store %arg7[%c0_2, %c0_3, %c0_4], %1 {strides = array<i32>} : memref<2x11x32xbf16, #tpu.memory_space<vmem>>, vector<2x8x32xbf16>,
    %cst = arith.constant 0.000000e+00 : bf16
    %3 = vector.broadcast %cst : bf16 to vector<2x3x32xbf16>
    %c0_5 = arith.constant 0 : index
    %c8 = arith.constant 8 : index
    %c0_6 = arith.constant 0 : index
    %4 = vector.load %arg7[%c0_5, %c8, %c0_6] : memref<2x11x32xbf16, #tpu.memory_space<vmem>>, vector<2x3x32xbf16>
    tpu.vector_store %arg7[%c0_5, %c8, %c0_6], %3 {strides = array<i32>} : memref<2x11x32xbf16, #tpu.memory_space<vmem>>, vector<2x3x32xbf16>,
    %c0_7 = arith.constant 0 : index
    %c0_8 = arith.constant 0 : index
    %c0_9 = arith.constant 0 : index
    %5 = vector.load %arg7[%c0_7, %c0_8, %c0_9] : memref<2x11x32xbf16, #tpu.memory_space<vmem>>, vector<2x8x32xbf16>
    %c0_10 = arith.constant 0 : index
    %c1 = arith.constant 1 : index
    %c0_11 = arith.constant 0 : index
    %6 = vector.load %arg7[%c0_10, %c1, %c0_11] : memref<2x11x32xbf16, #tpu.memory_space<vmem>>, vector<2x8x32xbf16>
    %c0_12 = arith.constant 0 : index
    %c2 = arith.constant 2 : index
    %c0_13 = arith.constant 0 : index
    %7 = vector.load %arg7[%c0_12, %c2, %c0_13] : memref<2x11x32xbf16, #tpu.memory_space<vmem>>, vector<2x8x32xbf16>
    %c0_14 = arith.constant 0 : index
    %c3 = arith.constant 3 : index
    %c0_15 = arith.constant 0 : index
    %8 = vector.load %arg7[%c0_14, %c3, %c0_15] : memref<2x11x32xbf16, #tpu.memory_space<vmem>>, vector<2x8x32xbf16>
    %9 = tpu.concatenate %5, %6, %7, %8 in 2 : vector<2x8x32xbf16>, vector<2x8x32xbf16>, vector<2x8x32xbf16>, vector<2x8x32xbf16> -> vector<2x8x128xbf16>
    %c0_16 = arith.constant 0 : index
    %c0_17 = arith.constant 0 : index
    %10 = vector.load %arg2[%c0_16, %c0_17] : memref<128x128xbf16, #tpu.memory_space<vmem>>, vector<128x128xbf16>
    %cst_18 = arith.constant dense<0.000000e+00> : vector<2x8x128xf32>
    %11 = tpu.matmul %9, %10, %cst_18 {dimension_numbers = #tpu.dot_dimension_numbers<[2], [0], [0, 1], [1], [0, 0, 0, 1, 1, 1], [], []>} : vector<2x8x128xbf16>, vector<128x128xbf16>, vector<2x8x128xf32> -> vector<2x8x128xf32>
    %c0_19 = arith.constant 0 : index
    %c0_20 = arith.constant 0 : index
    %c0_21 = arith.constant 0 : index
    %12 = vector.load %arg3[%c0_19, %c0_20, %c0_21] : memref<1x8x128xf32, #tpu.memory_space<vmem>>, vector<1x8x128xf32>
    %13 = vector.broadcast %12 : vector<1x8x128xf32> to vector<2x8x128xf32>
    %14 = arith.addf %11, %13 : vector<2x8x128xf32>
    %cst_22 = arith.constant 0.000000e+00 : f32
    %15 = vector.broadcast %cst_22 : f32 to vector<2x8x128xf32>
    %16 = arith.maximumf %14, %15 : vector<2x8x128xf32>
    %cst_23 = arith.constant dense<0xFF800000> : vector<2x128xf32>
    %17 = vector.multi_reduction <maximumf>, %16, %cst_23 [1] : vector<2x8x128xf32> to vector<2x128xf32>
    %18 = arith.truncf %17 : vector<2x128xf32> to vector<2x128xbf16>
    %c0_24 = arith.constant 0 : index
    %c0_25 = arith.constant 0 : index
    %19 = vector.load %arg4[%c0_24, %c0_25] : memref<128x4xbf16, #tpu.memory_space<vmem>>, vector<128x4xbf16>
    %cst_26 = arith.constant dense<0.000000e+00> : vector<2x4xf32>
    %20 = tpu.matmul %18, %19, %cst_26 {dimension_numbers = #tpu.dot_dimension_numbers<[1], [0], [0], [1], [0, 0, 1, 1], [], []>} : vector<2x128xbf16>, vector<128x4xbf16>, vector<2x4xf32> -> vector<2x4xf32>
    %c0_27 = arith.constant 0 : index
    %c0_28 = arith.constant 0 : index
    %21 = vector.load %arg5[%c0_27, %c0_28] : memref<1x4xf32, #tpu.memory_space<vmem>>, vector<1x4xf32>
    %22 = vector.broadcast %21 : vector<1x4xf32> to vector<2x4xf32>
    %23 = arith.addf %20, %22 : vector<2x4xf32>
    %cst_29 = arith.constant dense<0xFF800000> : vector<2xf32>
    %24 = vector.multi_reduction <maximumf>, %23, %cst_29 [1] : vector<2x4xf32> to vector<2xf32>
    %25 = vector.shape_cast %24 : vector<2xf32> to vector<2x1xf32>
    %26 = vector.broadcast %25 : vector<2x1xf32> to vector<2x4xf32>
    %27 = arith.subf %23, %26 : vector<2x4xf32>
    %28 = math.exp %27 : vector<2x4xf32>
    %cst_30 = arith.constant dense<0.000000e+00> : vector<2xf32>
    %29 = vector.multi_reduction <add>, %28, %cst_30 [1] : vector<2x4xf32> to vector<2xf32>
    %30 = vector.shape_cast %29 : vector<2xf32> to vector<2x1xf32>
    %31 = math.log %30 : vector<2x1xf32>
    %32 = vector.broadcast %31 : vector<2x1xf32> to vector<2x4xf32>
    %33 = arith.subf %27, %32 : vector<2x4xf32>
    %c0_31 = arith.constant 0 : index
    %c0_32 = arith.constant 0 : index
    %34 = vector.load %arg6[%c0_31, %c0_32] : memref<2x4xf32, #tpu.memory_space<vmem>>, vector<2x4xf32>
    tpu.vector_store %arg6[%c0_31, %c0_32], %33 {strides = array<i32>} : memref<2x4xf32, #tpu.memory_space<vmem>>, vector<2x4xf32>,
    return
  }
  func.func @transform_0(%arg0: i32) -> (i32, i32, i32) {
    %c0_i32 = arith.constant 0 : i32
    %c0_i32_0 = arith.constant 0 : i32
    %c0_i32_1 = arith.constant 0 : i32
    return %arg0, %c0_i32, %c0_i32_0 : i32, i32, i32
  }
  func.func @transform_1(%arg0: i32) -> (i32, i32) {
    %c0_i32 = arith.constant 0 : i32
    %c0_i32_0 = arith.constant 0 : i32
    %c0_i32_1 = arith.constant 0 : i32
    return %c0_i32, %c0_i32_0 : i32, i32
  }
  func.func @transform_2(%arg0: i32) -> (i32, i32, i32) {
    %c0_i32 = arith.constant 0 : i32
    %c0_i32_0 = arith.constant 0 : i32
    %c0_i32_1 = arith.constant 0 : i32
    %c0_i32_2 = arith.constant 0 : i32
    return %c0_i32, %c0_i32_0, %c0_i32_1 : i32, i32, i32
  }
  func.func @transform_3(%arg0: i32) -> (i32, i32) {
    %c0_i32 = arith.constant 0 : i32
    %c0_i32_0 = arith.constant 0 : i32
    %c0_i32_1 = arith.constant 0 : i32
    return %c0_i32, %c0_i32_0 : i32, i32
  }
  func.func @transform_4(%arg0: i32) -> (i32, i32) {
    %c0_i32 = arith.constant 0 : i32
    %c0_i32_0 = arith.constant 0 : i32
    %c0_i32_1 = arith.constant 0 : i32
    return %c0_i32, %c0_i32_0 : i32, i32
  }
  func.func @transform_5(%arg0: i32) -> (i32, i32) {
    %c0_i32 = arith.constant 0 : i32
    %c0_i32_0 = arith.constant 0 : i32
    return %arg0, %c0_i32 : i32, i32
  }
}

</mosaic_0001>

<llo_original>
// kernel: tpu_custom_call.1
$region0: #{tpu_custom_call.1}
  #allocation0 [shape = 'u32[]', space=smem, size = 0x4, offset = 0x4, fixed_abs, tag = 'smem constant byte address 0x4 - core index']
  #allocation1 [shape = 'u32[144,128]{1,0:T(1,128)}', space=vmem, size = 0x12000, scoped, tag = 'internal scratch']
  %s0 = inlined_call_operand.hbm [shape: f32[8,128], index: 0, kind: input, shape index: {}]
  %s1 = inlined_call_operand.hbm [shape: f32[16,128], index: 1, kind: output, shape index: {}]
  %s2 = sld [smem:[#allocation0]]
  $region41: #{tpu_custom_call.1} parent=0
    _
  %s4 = ssub.s32 1, %s2
  %s5 = scalar_select 0, %s4, %s2
  $region1: #{tpu_custom_call.1} parent=0
    #allocation2 [shape = 'u8[4096]{0}', space=vmem, size = 0x1000, scoped, tag = 'input window, operand 0, single buffered']
    #allocation3 [shape = 's32[2]{0}', space=sflag, size = 0x8, scoped, tag = 'scoped memory for tpu_custom_call.1']
    #allocation4 [shape = 's32[2]{0}', space=sflag, size = 0x8, scoped, tag = 'scoped memory for tpu_custom_call.1']
    #allocation5 [shape = 'u8[8192]{0}', space=vmem, size = 0x2000, scoped, tag = 'output window, operand 0']
    %6 = vsyncpa [#allocation3], 0
    %7 = vsyncpa [#allocation4], 0
    %s8 = scalar_lea.sflag [#allocation4], 1
    %9 = vsyncpa %s8, 0
    loop: start=0, step=1, limit=4
    $region2: #{tpu_custom_call.1} parent=1 // loop_pre_header
      _
    $region3: #{tpu_custom_call.1} parent=1 // loop_header
      %s11 = sphi 0, %s15
      %p12 = scmp.ge.s32.totalorder %s11, 4
      %s19 = sphi 0, %s19
      %s21 = sphi 0, %s19
      %s22 = sphi 0, %s21
      %s36 = sphi 0, %s22
      %s42 = sphi 0, %s44
      %s45 = sphi 0, %s42
      %s46 = sphi 0, %s45
      %s62 = sphi 0, %s46
    $region4: #{tpu_custom_call.1} parent=1 // loop_header_branch
      %14 = sbr.rel (%p12) target = $region8
    $region5: #{tpu_custom_call.1} parent=1 // loop_body
      %s16 = ssub.s32 %s11, 1
      %s17 = ssub.s32 %s11, 2
      %s18 = sadd.s32 %s11, 1
      %s20 = sadd.s32 %s19, 1
      %p23 = scmp.eq.s32.totalorder %s11, 1
      %p24 = scmp.ne.s32.totalorder %s19, %s21
      %p25 = scmp.eq.s32.totalorder %s11, 0
      %p26 = por %p24, %p25
      %p27 = scmp.ne.s32.totalorder %s19, %s21
      %p28 = scmp.eq.s32.totalorder %s16, 1
      %p29 = por %p27, %p28
      %p30 = scmp.ne.s32.totalorder %s21, %s22
      %p31 = scmp.eq.s32.totalorder %s16, 0
      %p32 = por %p30, %p31
      %p33 = scmp.ne.s32.totalorder %s21, %s22
      %p34 = scmp.eq.s32.totalorder %s17, 1
      %p35 = por %p33, %p34
      %p37 = scmp.ne.s32.totalorder %s22, %s36
      %p38 = scmp.eq.s32.totalorder %s17, 0
      %p39 = por %p37, %p38
      %s40 = ssub.s32 %s11, %s18
      %p41 = scmp.eq.s32.totalorder %s40, 0
      %s43 = sadd.s32 %s42, 1
      %s44 = scalar_select %p41, %s42, %s43
      %p47 = pneg %p41
      %p48 = scmp.eq.s32.totalorder %s11, 1
      %p49 = por %p47, %p48
      %p50 = scmp.ne.s32.totalorder %s42, %s45
      %p51 = scmp.eq.s32.totalorder %s11, 0
      %p52 = por %p50, %p51
      %p53 = scmp.ne.s32.totalorder %s42, %s45
      %p54 = scmp.eq.s32.totalorder %s16, 1
      %p55 = por %p53, %p54
      %p56 = scmp.ne.s32.totalorder %s45, %s46
      %p57 = scmp.eq.s32.totalorder %s16, 0
      %p58 = por %p56, %p57
      %p59 = scmp.ne.s32.totalorder %s45, %s46
      %p60 = scmp.eq.s32.totalorder %s17, 1
      %p61 = por %p59, %p60
      %p63 = scmp.ne.s32.totalorder %s46, %s62
      %p64 = scmp.eq.s32.totalorder %s17, 0
      %p65 = por %p63, %p64
      %p66 = scmp.le.s32.totalorder 1, %s11
      %p67 = scmp.lt.s32.totalorder %s11, 3
      %p68 = pnand %p66, %p67
      %p69 = pneg %p68
      // Predicated region
      $region9: #{tpu_custom_call.1} parent=5 // pred_check
        _
      $region10: #{tpu_custom_call.1} parent=5 // pred_check_branch
        %71 = sbr.rel (%p68) target = $region12
      $region11: #{tpu_custom_call.1} parent=5 // pred_region
        %s72 = ssub.s32 %s11, 1
        // Predicated region
        $region13: #{tpu_custom_call.1} parent=11 // pred_check
          %p73 = pneg %p32
        $region14: #{tpu_custom_call.1} parent=11 // pred_check_branch
          %75 = sbr.rel (%p73) target = $region16
        $region15: #{tpu_custom_call.1} parent=11 // pred_region
          %s77 = ssub.s32 128, 128
          %78 = vsyncadd [#allocation3], %s77
          %s80 = sshll.u32 [#allocation2], 4
          %s81 = int_to_ptr.vmem [resolvable:$true] %s80
          %83 = dma.hbm_to_vmem [thread:$0]  %s0, 128, %s81, [#allocation3]
        $region16: #{tpu_custom_call.1} parent=11 // pred_fallthru
          _
      $region12: #{tpu_custom_call.1} parent=5 // pred_fallthru
        _
      %p84 = scmp.lt.s32.totalorder %s11, 2
      // Predicated region
      $region17: #{tpu_custom_call.1} parent=5 // pred_check
        %p85 = pneg %p84
      $region18: #{tpu_custom_call.1} parent=5 // pred_check_branch
        %87 = sbr.rel (%p85) target = $region20
      $region19: #{tpu_custom_call.1} parent=5 // pred_region
        _
      $region20: #{tpu_custom_call.1} parent=5 // pred_fallthru
        _
      %p88 = scmp.le.s32.totalorder 1, %s11
      %p89 = scmp.lt.s32.totalorder %s11, 3
      %p90 = pnand %p88, %p89
      %p91 = pneg %p90
      // Predicated region
      $region21: #{tpu_custom_call.1} parent=5 // pred_check
        _
      $region22: #{tpu_custom_call.1} parent=5 // pred_check_branch
        %93 = sbr.rel (%p90) target = $region24
      $region23: #{tpu_custom_call.1} parent=5 // pred_region
        %s94 = ssub.s32 %s11, 1
        // Predicated region
        $region25: #{tpu_custom_call.1} parent=23 // pred_check
          %p95 = pneg %p32
        $region26: #{tpu_custom_call.1} parent=23 // pred_check_branch
          %97 = sbr.rel (%p95) target = $region28
        $region27: #{tpu_custom_call.1} parent=23 // pred_region
          %98 = dma.done [#allocation3], 128
        $region28: #{tpu_custom_call.1} parent=23 // pred_fallthru
          _
        %p99 = pneg %p32
        %p100 = pneg %p29
        %p101 = pneg %p58
        %p102 = pneg %p55
        %s103 = sand.u32 %s45, 1
        %s104 = scalar_lea.sflag [#allocation4], %s103
        %s105 = sand.u32 %s45, 1
        %s106 = smul.addr %s105, 8
        %s107 = scalar_lea.vmem [#allocation5], %s106
        %v108 = vld [vmem:[#allocation2] sm:$0xff]
        %109 = vst [vmem:[%s107] sm:$0xff] %v108
        %s110 = sand.u32 %s45, 1
        %s111 = scalar_lea.sflag [#allocation4], %s110
        %s112 = sand.u32 %s45, 1
        %s113 = smul.addr %s112, 8
        %s114 = scalar_lea.vmem [#allocation5], %s113
        // Predicated region
        $region29: #{tpu_custom_call.1} parent=23 // pred_check
          %p115 = pneg %p55
        $region30: #{tpu_custom_call.1} parent=23 // pred_check_branch
          %117 = sbr.rel (%p115) target = $region32
        $region31: #{tpu_custom_call.1} parent=23 // pred_region
          %s119 = ssub.s32 128, 128
          %120 = vsyncadd %s111, %s119
          %s121 = smul.addr %s16, 128
          %s122 = scalar_lea.hbm %s1, %s121
          %s124 = sshll.u32 %s114, 4
          %s125 = int_to_ptr.vmem [resolvable:$true] %s124
          %127 = dma.vmem_to_hbm [thread:$0]  %s125, 128, %s122, %s111
        $region32: #{tpu_custom_call.1} parent=23 // pred_fallthru
          _
      $region24: #{tpu_custom_call.1} parent=5 // pred_fallthru
        _
      %p128 = scmp.le.s32.totalorder 2, %s11
      // Predicated region
      $region33: #{tpu_custom_call.1} parent=5 // pred_check
        %p129 = pneg %p128
      $region34: #{tpu_custom_call.1} parent=5 // pred_check_branch
        %131 = sbr.rel (%p129) target = $region36
      $region35: #{tpu_custom_call.1} parent=5 // pred_region
        %s132 = ssub.s32 %s11, 2
        // Predicated region
        $region37: #{tpu_custom_call.1} parent=35 // pred_check
          %p133 = pneg %p61
        $region38: #{tpu_custom_call.1} parent=35 // pred_check_branch
          %135 = sbr.rel (%p133) target = $region40
        $region39: #{tpu_custom_call.1} parent=35 // pred_region
          %s136 = sand.u32 %s46, 1
          %s137 = scalar_lea.sflag [#allocation4], %s136
          %s138 = sand.u32 %s46, 1
          %s139 = smul.addr %s138, 8
          %s140 = scalar_lea.vmem [#allocation5], %s139
          %141 = dma.done %s137, 128
        $region40: #{tpu_custom_call.1} parent=35 // pred_fallthru
          _
      $region36: #{tpu_custom_call.1} parent=5 // pred_fallthru
        _
    $region6: #{tpu_custom_call.1} parent=1 // loop_footer
      %s15 = sadd.s32 1, %s11
    $region7: #{tpu_custom_call.1} parent=1 // loop_footer_branch
      %10 = sbr.rel target = $region3
    $region8: #{tpu_custom_call.1} parent=1 // loop_exit
      _
    %142 = vsyncpa [#allocation3], 1
    %s143 = scalar_lea.sflag [#allocation3], 1
    %144 = vsyncpa %s143, 1
    %145 = vsyncpa [#allocation4], 1
    %s146 = scalar_lea.sflag [#allocation4], 1
    %147 = vsyncpa %s146, 1

// kernel: tpu_custom_call.1
$region0: #{tpu_custom_call.1}
  #allocation0 [shape = 'u32[]', space=smem, size = 0x4, offset = 0x4, fixed_abs, tag = 'smem constant byte address 0x4 - core index']
  #allocation1 [shape = 'u32[144,128]{1,0:T(1,128)}', space=vmem, size = 0x12000, scoped, tag = 'internal scratch']
  #allocation2 [shape = 'bf16[2,11,32]{2,1,0:T(8,128)(2,1)}', space=vmem, size = 0x2000, scoped, tag = 'scratch operand']
  %s0 = inlined_call_operand.hbm [shape: f32[2,8,32], index: 0, kind: input, shape index: {}]
  %s1 = inlined_call_operand.vmem [shape: bf16[128,128], index: 1, kind: input, shape index: {}]
  %s2 = inlined_call_operand.vmem [shape: f32[1,8,128], index: 2, kind: input, shape index: {}]
  %s3 = inlined_call_operand.vmem [shape: bf16[128,4], index: 3, kind: input, shape index: {}]
  %s4 = inlined_call_operand.vmem [shape: f32[1,4], index: 4, kind: input, shape index: {}]
  %s5 = inlined_call_operand.hbm [shape: f32[2,4], index: 5, kind: output, shape index: {}]
  %s6 = sld [smem:[#allocation0]]
  $region34: #{tpu_custom_call.1} parent=0
    _
  %s8 = ssub.s32 1, %s6
  %s9 = scalar_select 0, %s8, %s6
  $region1: #{tpu_custom_call.1} parent=0
    #allocation3 [shape = 'u8[8192]{0}', space=vmem, size = 0x2000, scoped, tag = 'input window, operand 0, single buffered']
    #allocation4 [shape = 's32[1]{0}', space=sflag, size = 0x4, scoped, tag = 'scoped memory for tpu_custom_call.1']
    #allocation5 [shape = 's32[1]{0}', space=sflag, size = 0x4, scoped, tag = 'scoped memory for tpu_custom_call.1']
    #allocation6 [shape = 'u8[1024]{0}', space=vmem, size = 0x400, scoped, tag = 'output window, operand 0, single buffered']
    %10 = vsyncpa [#allocation4], 0
    %11 = vsyncpa [#allocation5], 0
    // Predicated region
    $region2: #{tpu_custom_call.1} parent=1 // pred_check
      _
    $region3: #{tpu_custom_call.1} parent=1 // pred_check_branch
      %13 = sbr.rel (0) target = $region5
    $region4: #{tpu_custom_call.1} parent=1 // pred_region
      %s15 = ssub.s32 256, 256
      %16 = vsyncadd [#allocation4], %s15
      %s17 = sshll.u32 [#allocation3], 4
      %s18 = int_to_ptr.vmem [resolvable:$true] %s17
      %23 = dma.hbm_to_vmem [thread:$0]  %s0, 256, %s18, [#allocation4], 128, 128, 8
    $region5: #{tpu_custom_call.1} parent=1 // pred_fallthru
      _
    // Predicated region
    $region6: #{tpu_custom_call.1} parent=1 // pred_check
      _
    $region7: #{tpu_custom_call.1} parent=1 // pred_check_branch
      %25 = sbr.rel (0) target = $region9
    $region8: #{tpu_custom_call.1} parent=1 // pred_region
      _
    $region9: #{tpu_custom_call.1} parent=1 // pred_fallthru
      _
    // Predicated region
    $region10: #{tpu_custom_call.1} parent=1 // pred_check
      _
    $region11: #{tpu_custom_call.1} parent=1 // pred_check_branch
      %27 = sbr.rel (0) target = $region13
    $region12: #{tpu_custom_call.1} parent=1 // pred_region
      _
    $region13: #{tpu_custom_call.1} parent=1 // pred_fallthru
      _
    // Predicated region
    $region14: #{tpu_custom_call.1} parent=1 // pred_check
      _
    $region15: #{tpu_custom_call.1} parent=1 // pred_check_branch
      %29 = sbr.rel (0) target = $region17
    $region16: #{tpu_custom_call.1} parent=1 // pred_region
      _
    $region17: #{tpu_custom_call.1} parent=1 // pred_fallthru
      _
    // Predicated region
    $region18: #{tpu_custom_call.1} parent=1 // pred_check
      _
    $region19: #{tpu_custom_call.1} parent=1 // pred_check_branch
      %31 = sbr.rel (0) target = $region21
    $region20: #{tpu_custom_call.1} parent=1 // pred_region
      _
    $region21: #{tpu_custom_call.1} parent=1 // pred_fallthru
      _
    // Predicated region
    $region22: #{tpu_custom_call.1} parent=1 // pred_check
      _
    $region23: #{tpu_custom_call.1} parent=1 // pred_check_branch
      %33 = sbr.rel (0) target = $region25
    $region24: #{tpu_custom_call.1} parent=1 // pred_region
      %34 = dma.done [#allocation4], 256
    $region25: #{tpu_custom_call.1} parent=1 // pred_fallthru
      _
    %v36 = vld [vmem:[#allocation3] sm:$0xff]
    %v37 = vld [vmem:[#allocation3 + $0x8] sm:$0xff]
    %v38 = vpack.c.bf16 %v36, %v36
    %v39 = vpack.c.bf16 %v37, %v37
    %vm40 = vcmask 257024
    %41 = vst.msk [vmem:[#allocation2] sm:$0xf] %vm40, %v38
    %42 = vst.msk [vmem:[#allocation2 + $0x8] sm:$0xf] %vm40, %v39
    %vm43 = vcmask 254976
    %vm44 = vsmask.f32 1280
    %vm45 = vmand %vm43, %vm44
    %v46 = vld [vmem:[#allocation2 + $0x4] sm:$0x3]
    %v47 = vsel %vm45, 0, %v46
    %48 = vst [vmem:[#allocation2 + $0x4] sm:$0x3] %v47
    %v49 = vld [vmem:[#allocation2 + $0xc] sm:$0x3]
    %v50 = vsel %vm45, 0, %v49
    %51 = vst [vmem:[#allocation2 + $0xc] sm:$0x3] %v50
    %v52 = vld [vmem:[#allocation2] sm:$0xf]
    %v53 = vld [vmem:[#allocation2 + $0x8] sm:$0xf]
    %v54 = vld [vmem:[#allocation2 + $0x4] sm:$0x1]
    %v55 = vld [vmem:[#allocation2 + $0xc] sm:$0x1]
    %v56 = vld [vmem:[#allocation2] sm:$0xe]
    %v57 = vld [vmem:[#allocation2 + $0x8] sm:$0xe]
    %v58 = vld [vmem:[#allocation2 + $0x4] sm:$0x3]
    %v59 = vld [vmem:[#allocation2 + $0xc] sm:$0x3]
    %v64 = vunpack.c.l.b16 %v52
    %v65 = vunpack.c.l.b16 %v54
    %v66 = vunpack.c.l.b16 %v53
    %v67 = vunpack.c.l.b16 %v55
    %v68 = vpack.c.b16 %v65, %v64
    %v69 = vpack.c.b16 %v67, %v66
    %v71 = vshrl.u32 %v68, 16
    %v73 = vshll.u32 %v68, 16
    %v75 = vrot.slane %v73, 1
    %v76 = vor.u32 %v71, %v75
    %v78 = vshrl.u32 %v69, 16
    %v80 = vshll.u32 %v69, 16
    %v82 = vrot.slane %v80, 1
    %v83 = vor.u32 %v78, %v82
    %84 = vrot.lane.b32.xlu0 %v76, 32
    %v85 = vpop.permute.xlu0 %84
    %86 = vrot.lane.b32.xlu0 %v83, 32
    %v87 = vpop.permute.xlu0 %86
    %v90 = vunpack.c.l.b16 %v56
    %v91 = vunpack.c.l.b16 %v57
    %v92 = vpack.c.b16 %v65, %v90
    %v93 = vpack.c.b16 %v67, %v91
    %v94 = vrot.slane %v92, 1
    %v95 = vrot.slane %v93, 1
    %96 = vrot.lane.b32.xlu0 %v94, 64
    %v97 = vpop.permute.xlu0 %96
    %98 = vrot.lane.b32.xlu0 %v95, 64
    %v99 = vpop.permute.xlu0 %98
    %v102 = vunpack.c.l.b16 %v58
    %v103 = vunpack.c.l.b16 %v59
    %v104 = vpack.c.b16 %v102, %v90
    %v105 = vpack.c.b16 %v103, %v91
    %v107 = vshrl.u32 %v104, 16
    %v109 = vrot.slane %v107, 1
    %v110 = vshll.u32 %v104, 16
    %v112 = vrot.slane %v110, 2
    %v113 = vor.u32 %v109, %v112
    %v115 = vshrl.u32 %v105, 16
    %v117 = vrot.slane %v115, 1
    %v118 = vshll.u32 %v105, 16
    %v120 = vrot.slane %v118, 2
    %v121 = vor.u32 %v117, %v120
    %122 = vrot.lane.b32.xlu0 %v113, 96
    %v123 = vpop.permute.xlu0 %122
    %124 = vrot.lane.b32.xlu0 %v121, 96
    %v125 = vpop.permute.xlu0 %124
    %vm126 = vcmask 261120
    %v129 = vsel %vm126, %v52, %v85
    %v132 = vsel %vm126, %v53, %v87
    %vm133 = vcmask 523264
    %v135 = vsel %vm133, %v129, %v97
    %v137 = vsel %vm133, %v132, %v99
    %vm138 = vcmask 785408
    %v140 = vsel %vm138, %v135, %v123
    %v142 = vsel %vm138, %v137, %v125
    %v143 = vld [vmem:[%s1] sm:$0xf]
    %v144 = vld [vmem:[%s1 + $0x4] sm:$0xf]
    %v145 = vld [vmem:[%s1 + $0x8] sm:$0xf]
    %v146 = vld [vmem:[%s1 + $0xc] sm:$0xf]
    %v147 = vld [vmem:[%s1 + $0x10] sm:$0xf]
    %v148 = vld [vmem:[%s1 + $0x14] sm:$0xf]
    %v149 = vld [vmem:[%s1 + $0x18] sm:$0xf]
    %v150 = vld [vmem:[%s1 + $0x1c] sm:$0xf]
    %v151 = vld [vmem:[%s1 + $0x20] sm:$0xf]
    %v152 = vld [vmem:[%s1 + $0x24] sm:$0xf]
    %v153 = vld [vmem:[%s1 + $0x28] sm:$0xf]
    %v154 = vld [vmem:[%s1 + $0x2c] sm:$0xf]
    %v155 = vld [vmem:[%s1 + $0x30] sm:$0xf]
    %v156 = vld [vmem:[%s1 + $0x34] sm:$0xf]
    %v157 = vld [vmem:[%s1 + $0x38] sm:$0xf]
    %v158 = vld [vmem:[%s1 + $0x3c] sm:$0xf]
    %v159 = vld [vmem:[%s2] sm:$0xff]
    %v162 = vunpack.c.l.b16 %v140
    %v163 = vunpack.c.l.b16 %v142
    %v164 = vpack.c.b16 %v163, %v162
    %v182 = vunpack.c.l.b16 %v143
    %v183 = vunpack.c.l.b16 %v144
    %v184 = vunpack.c.l.b16 %v145
    %v185 = vunpack.c.l.b16 %v146
    %v186 = vunpack.c.l.b16 %v147
    %v187 = vunpack.c.l.b16 %v148
    %v188 = vunpack.c.l.b16 %v149
    %v189 = vunpack.c.l.b16 %v150
    %v190 = vunpack.c.l.b16 %v151
    %v191 = vunpack.c.l.b16 %v152
    %v192 = vunpack.c.l.b16 %v153
    %v193 = vunpack.c.l.b16 %v154
    %v194 = vunpack.c.l.b16 %v155
    %v195 = vunpack.c.l.b16 %v156
    %v196 = vunpack.c.l.b16 %v157
    %v197 = vunpack.c.l.b16 %v158
    %v198 = vpack.c.b16 %v183, %v182
    %v199 = vpack.c.b16 %v185, %v184
    %v200 = vpack.c.b16 %v187, %v186
    %v201 = vpack.c.b16 %v189, %v188
    %v202 = vpack.c.b16 %v191, %v190
    %v203 = vpack.c.b16 %v193, %v192
    %v204 = vpack.c.b16 %v195, %v194
    %v205 = vpack.c.b16 %v197, %v196
    %214 = vmatprep.subr.bf16.mxu0 0
    %215 = vmatpush1.bf16.msra.mxu0 %v198
    %216 = vmatprep.subr.bf16.mxu0 0
    %217 = vmatpush1.bf16.msra.mxu0 %v199
    %218 = vmatprep.subr.bf16.mxu0 0
    %219 = vmatpush1.bf16.msra.mxu0 %v200
    %220 = vmatprep.subr.bf16.mxu0 0
    %221 = vmatpush1.bf16.msra.mxu0 %v201
    %222 = vmatprep.subr.bf16.mxu0 0
    %223 = vmatpush1.bf16.msra.mxu0 %v202
    %224 = vmatprep.subr.bf16.mxu0 0
    %225 = vmatpush1.bf16.msra.mxu0 %v203
    %226 = vmatprep.subr.bf16.mxu0 0
    %227 = vmatpush1.bf16.msra.mxu0 %v204
    %228 = vmatprep.subr.bf16.mxu0 0
    %229 = vmatpush1.bf16.msra.mxu0 %v205
    %230 = vmatprep.subr.bf16.mxu0 0
    %231 = vmatpush1.bf16.msra.mxu0 0
    %232 = vmatprep.subr.bf16.mxu0 0
    %233 = vmatpush1.bf16.msra.mxu0 0
    %234 = vmatprep.subr.bf16.mxu0 0
    %235 = vmatpush1.bf16.msra.mxu0 0
    %236 = vmatprep.subr.bf16.mxu0 0
    %237 = vmatpush1.bf16.msra.mxu0 0
    %238 = vmatprep.subr.bf16.mxu0 0
    %239 = vmatpush1.bf16.msra.mxu0 0
    %240 = vmatprep.subr.bf16.mxu0 0
    %241 = vmatpush1.bf16.msra.mxu0 0
    %242 = vmatprep.subr.bf16.mxu0 0
    %243 = vmatpush1.bf16.msra.mxu0 0
    %244 = vmatprep.subr.bf16.mxu0 0
    %245 = vmatpush1.bf16.msra.mxu0 0
    %246 = vmatprep.mubr.bf16.mxu0 0
    %247 = vmatmul.mubr.bf16.gmra.mrb[0].mxu0 %v164
    %v248 = vpop.f32.mrb[0].mxu0
    %v249 = vadd.f32 %v159, %v248
    %v250 = vpop.f32.mrb[0].mxu0
    %v251 = vpop.f32.mrb[0].mxu0
    %v252 = vadd.f32 %v159, %v251
    %v253 = vpop.f32.mrb[0].mxu0
    %254 = vdwg.mxu0
    %v255 = vmax.f32 %v249, 0.0
    %v256 = vmax.f32 %v252, 0.0
    %v257 = vrot.slane %v255, 4
    %v258 = vmax.f32 %v255, %v257
    %v259 = vrot.slane %v258, 2
    %v260 = vmax.f32 %v258, %v259
    %v261 = vrot.slane %v260, 1
    %v262 = vmax.f32 %v260, %v261
    %v263 = vrot.slane %v256, 4
    %v264 = vmax.f32 %v256, %v263
    %v265 = vrot.slane %v264, 2
    %v266 = vmax.f32 %v264, %v265
    %v267 = vrot.slane %v266, 1
    %v268 = vmax.f32 %v266, %v267
    %v269 = vpack.c.bf16 %v262, %v262
    %v270 = vpack.c.bf16 %v268, %v268
    %v271 = vld [vmem:[%s3] sm:$0xf]
    %v272 = vld [vmem:[%s3 + $0x4] sm:$0xf]
    %v273 = vld [vmem:[%s3 + $0x8] sm:$0xf]
    %v274 = vld [vmem:[%s3 + $0xc] sm:$0xf]
    %v275 = vld [vmem:[%s3 + $0x10] sm:$0xf]
    %v276 = vld [vmem:[%s3 + $0x14] sm:$0xf]
    %v277 = vld [vmem:[%s3 + $0x18] sm:$0xf]
    %v278 = vld [vmem:[%s3 + $0x1c] sm:$0xf]
    %v279 = vld [vmem:[%s3 + $0x20] sm:$0xf]
    %v280 = vld [vmem:[%s3 + $0x24] sm:$0xf]
    %v281 = vld [vmem:[%s3 + $0x28] sm:$0xf]
    %v282 = vld [vmem:[%s3 + $0x2c] sm:$0xf]
    %v283 = vld [vmem:[%s3 + $0x30] sm:$0xf]
    %v284 = vld [vmem:[%s3 + $0x34] sm:$0xf]
    %v285 = vld [vmem:[%s3 + $0x38] sm:$0xf]
    %v286 = vld [vmem:[%s3 + $0x3c] sm:$0xf]
    %v287 = vld [vmem:[%s4] sm:$0x1]
    %v289 = vlaneseq
    %v290 = vshrl.u32 %v289, 7
    %v291 = vsub.s32 0, %v290
    %v292 = vrot.slane %v287, %v291
    %v296 = vunpack.c.l.b16 %v269
    %v297 = vunpack.c.l.b16 %v270
    %vm298 = vcmask 1041409
    %v299 = vsel %vm298, %v297, %v296
    %v300 = vpack.c.b16 %v299, %v299
    %v318 = vunpack.c.l.b16 %v271
    %v319 = vunpack.c.l.b16 %v272
    %v320 = vunpack.c.l.b16 %v273
    %v321 = vunpack.c.l.b16 %v274
    %v322 = vunpack.c.l.b16 %v275
    %v323 = vunpack.c.l.b16 %v276
    %v324 = vunpack.c.l.b16 %v277
    %v325 = vunpack.c.l.b16 %v278
    %v326 = vunpack.c.l.b16 %v279
    %v327 = vunpack.c.l.b16 %v280
    %v328 = vunpack.c.l.b16 %v281
    %v329 = vunpack.c.l.b16 %v282
    %v330 = vunpack.c.l.b16 %v283
    %v331 = vunpack.c.l.b16 %v284
    %v332 = vunpack.c.l.b16 %v285
    %v333 = vunpack.c.l.b16 %v286
    %v334 = vpack.c.b16 %v319, %v318
    %v335 = vpack.c.b16 %v321, %v320
    %v336 = vpack.c.b16 %v323, %v322
    %v337 = vpack.c.b16 %v325, %v324
    %v338 = vpack.c.b16 %v327, %v326
    %v339 = vpack.c.b16 %v329, %v328
    %v340 = vpack.c.b16 %v331, %v330
    %v341 = vpack.c.b16 %v333, %v332
    %350 = vmatprep.subr.bf16.mxu0 0
    %351 = vmatpush1.bf16.msra.mxu0 %v334
    %352 = vmatprep.subr.bf16.mxu0 0
    %353 = vmatpush1.bf16.msra.mxu0 %v335
    %354 = vmatprep.subr.bf16.mxu0 0
    %355 = vmatpush1.bf16.msra.mxu0 %v336
    %356 = vmatprep.subr.bf16.mxu0 0
    %357 = vmatpush1.bf16.msra.mxu0 %v337
    %358 = vmatprep.subr.bf16.mxu0 0
    %359 = vmatpush1.bf16.msra.mxu0 %v338
    %360 = vmatprep.subr.bf16.mxu0 0
    %361 = vmatpush1.bf16.msra.mxu0 %v339
    %362 = vmatprep.subr.bf16.mxu0 0
    %363 = vmatpush1.bf16.msra.mxu0 %v340
    %364 = vmatprep.subr.bf16.mxu0 0
    %365 = vmatpush1.bf16.msra.mxu0 %v341
    %366 = vmatprep.subr.bf16.mxu0 0
    %367 = vmatpush1.bf16.msra.mxu0 0
    %368 = vmatprep.subr.bf16.mxu0 0
    %369 = vmatpush1.bf16.msra.mxu0 0
    %370 = vmatprep.subr.bf16.mxu0 0
    %371 = vmatpush1.bf16.msra.mxu0 0
    %372 = vmatprep.subr.bf16.mxu0 0
    %373 = vmatpush1.bf16.msra.mxu0 0
    %374 = vmatprep.subr.bf16.mxu0 0
    %375 = vmatpush1.bf16.msra.mxu0 0
    %376 = vmatprep.subr.bf16.mxu0 0
    %377 = vmatpush1.bf16.msra.mxu0 0
    %378 = vmatprep.subr.bf16.mxu0 0
    %379 = vmatpush1.bf16.msra.mxu0 0
    %380 = vmatprep.subr.bf16.mxu0 0
    %381 = vmatpush1.bf16.msra.mxu0 0
    %382 = vmatprep.mubr.bf16.mxu0 0
    %383 = vmatmul.mubr.bf16.gmra.mrb[0].mxu0 %v300
    %v384 = vpop.f32.mrb[0].mxu0
    %v385 = vadd.f32 %v292, %v384
    %v386 = vpop.f32.mrb[0].mxu0
    %v387 = vpop.f32.mrb[0].mxu0
    %v388 = vpop.f32.mrb[0].mxu0
    %389 = vdwg.mxu0
    %vm390 = vcmask 25600
    %v391 = vsel %vm390, %v385, -inf
    %392 = vmax.xlane.f32.xlu0 %v391
    %v393 = vpop.xlane.xlu0 %392
    %v394 = vsub.f32 %v385, %v393
    %v395 = vmul.f32 %v394, 1.442695
    %v396 = vpow.pop %v395
    %v397 = vsel %vm390, %v396, 0.0
    %398 = vadd.xlane.f32.xlu0 %v397
    %v399 = vpop.xlane.xlu0 %398
    %v400 = vlog2.pop %v399
    %v401 = vmul.f32 %v400, 0.6931472
    %v402 = vsub.f32 %v394, %v401
    %403 = vst.msk [vmem:[#allocation6] sm:$0x3] %vm390, %v402
    // Predicated region
    $region26: #{tpu_custom_call.1} parent=1 // pred_check
      _
    $region27: #{tpu_custom_call.1} parent=1 // pred_check_branch
      %405 = sbr.rel (0) target = $region29
    $region28: #{tpu_custom_call.1} parent=1 // pred_region
      %s407 = ssub.s32 32, 32
      %408 = vsyncadd [#allocation5], %s407
      %s410 = sshll.u32 [#allocation6], 4
      %s411 = int_to_ptr.vmem [resolvable:$true] %s410
      %413 = dma.vmem_to_hbm [thread:$0]  %s411, 32, %s5, [#allocation5]
    $region29: #{tpu_custom_call.1} parent=1 // pred_fallthru
      _
    // Predicated region
    $region30: #{tpu_custom_call.1} parent=1 // pred_check
      _
    $region31: #{tpu_custom_call.1} parent=1 // pred_check_branch
      %415 = sbr.rel (0) target = $region33
    $region32: #{tpu_custom_call.1} parent=1 // pred_region
      %416 = dma.done [#allocation5], 32
    $region33: #{tpu_custom_call.1} parent=1 // pred_fallthru
      _
    %417 = vsyncpa [#allocation4], 1
    %418 = vsyncpa [#allocation5], 1

</llo_original>
